<compile_context>
chip_gen: v6e
topology: v6e:2x2x1
jax: 0.10.0
libtpu: 0.0.40
codegen_flags: <defaults>
</compile_context>

<pallas_src>
import functools
import math

import jax
import jax.numpy as jnp
from jax.experimental import pallas as pl
from jax.experimental.pallas import tpu as pltpu


def _round_up(x, m):
    return (x + m - 1) // m * m


# ----------------------------------------------------------------------------
# Pallas kernel: fused matmul + bias (+ optional SiLU)
# ----------------------------------------------------------------------------
def _matmul_kernel(a_ref, w_ref, b_ref, o_ref, *, activation):
    acc = jnp.dot(a_ref[...], w_ref[...], preferred_element_type=jnp.float32)
    acc = acc + b_ref[...]
    if activation == "silu":
        acc = acc * jax.nn.sigmoid(acc)
    o_ref[...] = acc.astype(o_ref.dtype)


@functools.partial(jax.jit, static_argnames=("activation",))
def pallas_linear(a, w, b, activation=None):
    """a: (M, K) f32, w: (K, N) f32, b: (N,) f32 -> a @ w + b (opt. SiLU)."""
    M, K = a.shape
    N = w.shape[1]
    Mp = _round_up(M, 8)
    tm = min(256, Mp)
    Mp = _round_up(Mp, tm)
    if Mp != M:
        a = jnp.pad(a, ((0, Mp - M), (0, 0)))
    out = pl.pallas_call(
        functools.partial(_matmul_kernel, activation=activation),
        out_shape=jax.ShapeDtypeStruct((Mp, N), jnp.float32),
        grid_spec=pltpu.PrefetchScalarGridSpec(
            num_scalar_prefetch=0,
            grid=(Mp // tm,),
            in_specs=[
                pl.BlockSpec((tm, K), lambda i: (i, 0)),
                pl.BlockSpec((K, N), lambda i: (0, 0)),
                pl.BlockSpec((1, N), lambda i: (0, 0)),
            ],
            out_specs=pl.BlockSpec((tm, N), lambda i: (i, 0)),
        ),
        compiler_params=pltpu.CompilerParams(
            dimension_semantics=("parallel",)),
    )(a, w, b.reshape(1, N))
    return out[:M]


# Convolutions as im2col (JAX layout plumbing) + Pallas matmul (MXU compute).
@functools.partial(jax.jit, static_argnames=("stride", "padding"))
def pallas_conv2d(x, w, b, stride=1, padding=1):
    B, C, H, W = x.shape
    Cout, Cin, kh, kw = w.shape
    Ho = (H + 2 * padding - kh) // stride + 1
    Wo = (W + 2 * padding - kw) // stride + 1
    xp = jnp.pad(x, ((0, 0), (0, 0), (padding, padding), (padding, padding)))
    cols = []
    for i in range(kh):
        for j in range(kw):
            cols.append(xp[:, :, i:i + stride * Ho:stride, j:j + stride * Wo:stride])
    patches = jnp.stack(cols, axis=2)                        # (B, C, kh*kw, Ho, Wo)
    patches = patches.transpose(0, 3, 4, 1, 2).reshape(B * Ho * Wo, C * kh * kw)
    w2 = w.reshape(Cout, Cin * kh * kw).T                    # (Cin*kh*kw, Cout)
    y = pallas_linear(patches, w2, b)                        # (B*Ho*Wo, Cout)
    return y.reshape(B, Ho, Wo, Cout).transpose(0, 3, 1, 2)


@jax.jit
def pallas_conv1x1(x, w, b):
    """1x1 conv; w stored as (Cin, Cout)."""
    B, C, H, W = x.shape
    xf = x.transpose(0, 2, 3, 1).reshape(B * H * W, C)
    y = pallas_linear(xf, w, b)
    return y.reshape(B, H, W, -1).transpose(0, 3, 1, 2)


# ----------------------------------------------------------------------------
# Pallas kernel: fused GroupNorm(32) + optional SiLU
#   Operates on a grouped view (B, G, (C/G)*H*W) so the reduction axis and the
#   last block dim are one long lane-dense axis.
# ----------------------------------------------------------------------------
def _groupnorm_kernel(x_ref, g_ref, b_ref, o_ref, *, eps, silu):
    x = x_ref[0]                                    # (G, M)
    mean = jnp.mean(x, axis=1, keepdims=True)
    xc = x - mean
    var = jnp.mean(xc * xc, axis=1, keepdims=True)
    y = xc * jax.lax.rsqrt(var + eps)
    y = y * g_ref[...] + b_ref[...]
    if silu:
        y = y * jax.nn.sigmoid(y)
    o_ref[0] = y


@functools.partial(jax.jit, static_argnames=("silu", "num_groups"))
def pallas_groupnorm(x, gamma, beta, silu=False, num_groups=32):
    B, C, H, W = x.shape
    G = num_groups
    Cg = C // G
    M = Cg * H * W
    xg = x.reshape(B, G, M)
    ge = jnp.repeat(gamma.reshape(G, Cg, 1), H * W, axis=2).reshape(G, M)
    be = jnp.repeat(beta.reshape(G, Cg, 1), H * W, axis=2).reshape(G, M)
    out = pl.pallas_call(
        functools.partial(_groupnorm_kernel, eps=1e-5, silu=silu),
        out_shape=jax.ShapeDtypeStruct((B, G, M), jnp.float32),
        grid_spec=pltpu.PrefetchScalarGridSpec(
            num_scalar_prefetch=0,
            grid=(B,),
            in_specs=[
                pl.BlockSpec((1, G, M), lambda b: (b, 0, 0)),
                pl.BlockSpec((G, M), lambda b: (0, 0)),
                pl.BlockSpec((G, M), lambda b: (0, 0)),
            ],
            out_specs=pl.BlockSpec((1, G, M), lambda b: (b, 0, 0)),
        ),
        compiler_params=pltpu.CompilerParams(
            dimension_semantics=("parallel",)),
    )(xg, ge, be)
    return out.reshape(B, C, H, W)


# ----------------------------------------------------------------------------
# Pallas kernel: fused scale/shift FiLM + SiLU  (use_scale_shift_norm)
# ----------------------------------------------------------------------------
def _scale_shift_silu_kernel(h_ref, s_ref, sh_ref, o_ref):
    y = h_ref[0] * (1.0 + s_ref[0]) + sh_ref[0]
    o_ref[0] = y * jax.nn.sigmoid(y)


@jax.jit
def pallas_scale_shift_silu(h, scale, shift):
    B, C, H, W = h.shape
    hw = H * W
    out = pl.pallas_call(
        _scale_shift_silu_kernel,
        out_shape=jax.ShapeDtypeStruct((B, C, hw), jnp.float32),
        grid_spec=pltpu.PrefetchScalarGridSpec(
            num_scalar_prefetch=0,
            grid=(B,),
            in_specs=[
                pl.BlockSpec((1, C, hw), lambda b: (b, 0, 0)),
                pl.BlockSpec((1, C, 1), lambda b: (b, 0, 0)),
                pl.BlockSpec((1, C, 1), lambda b: (b, 0, 0)),
            ],
            out_specs=pl.BlockSpec((1, C, hw), lambda b: (b, 0, 0)),
        ),
        compiler_params=pltpu.CompilerParams(
            dimension_semantics=("parallel",)),
    )(h.reshape(B, C, hw), scale.reshape(B, C, 1), shift.reshape(B, C, 1))
    return out.reshape(B, C, H, W)


# ----------------------------------------------------------------------------
# Pallas kernel: per (batch*head) softmax attention (QKVAttentionLegacy math)
# ----------------------------------------------------------------------------
def _attn_kernel(q_ref, kt_ref, v_ref, o_ref, *, scale):
    q = q_ref[0] * scale                                   # (N, d)
    kt = kt_ref[0] * scale                                 # (d, N)
    s = jnp.dot(q, kt, preferred_element_type=jnp.float32)  # (N, N)
    s = s - jnp.max(s, axis=-1, keepdims=True)
    p = jnp.exp(s)
    p = p / jnp.sum(p, axis=-1, keepdims=True)
    o_ref[0] = jnp.dot(p, v_ref[0], preferred_element_type=jnp.float32)


@jax.jit
def pallas_attention(q, k, v):
    """q, k, v: (B*heads, N, d) -> (B*heads, N, d)."""
    BH, N, d = q.shape
    scale = 1.0 / math.sqrt(math.sqrt(d))
    kt = k.transpose(0, 2, 1)                              # (BH, d, N)
    return pl.pallas_call(
        functools.partial(_attn_kernel, scale=scale),
        out_shape=jax.ShapeDtypeStruct((BH, N, d), jnp.float32),
        grid_spec=pltpu.PrefetchScalarGridSpec(
            num_scalar_prefetch=0,
            grid=(BH,),
            in_specs=[
                pl.BlockSpec((1, N, d), lambda b: (b, 0, 0)),
                pl.BlockSpec((1, d, N), lambda b: (b, 0, 0)),
                pl.BlockSpec((1, N, d), lambda b: (b, 0, 0)),
            ],
            out_specs=pl.BlockSpec((1, N, d), lambda b: (b, 0, 0)),
        ),
        compiler_params=pltpu.CompilerParams(
            dimension_semantics=("parallel",)),
    )(q, kt, v)


# ----------------------------------------------------------------------------
# Pallas kernels: SiLU (small 2-D) and lane-dense elementwise add
# ----------------------------------------------------------------------------
def _silu_kernel(x_ref, o_ref):
    x = x_ref[...]
    o_ref[...] = x * jax.nn.sigmoid(x)


@jax.jit
def pallas_silu(x):
    return pl.pallas_call(
        _silu_kernel, out_shape=jax.ShapeDtypeStruct(x.shape, x.dtype))(x)


def _add_kernel(a_ref, b_ref, o_ref):
    o_ref[...] = a_ref[...] + b_ref[...]


@jax.jit
def pallas_add(a, b):
    """Elementwise add on a lane-dense flattened (B, C*H*W) view."""
    shape = a.shape
    B = shape[0]
    F = math.prod(shape[1:])
    af = a.reshape(B, F)
    bf = b.reshape(B, F)
    Fp = _round_up(F, 128)
    tf = min(Fp, 262144)              # <= 1 MiB f32 per buffer per array
    Fp = _round_up(Fp, tf)
    if Fp != F:
        af = jnp.pad(af, ((0, 0), (0, Fp - F)))
        bf = jnp.pad(bf, ((0, 0), (0, Fp - F)))
    out = pl.pallas_call(
        _add_kernel,
        out_shape=jax.ShapeDtypeStruct((B, Fp), jnp.float32),
        grid_spec=pltpu.PrefetchScalarGridSpec(
            num_scalar_prefetch=0,
            grid=(Fp // tf,),
            in_specs=[
                pl.BlockSpec((B, tf), lambda j: (0, j)),
                pl.BlockSpec((B, tf), lambda j: (0, j)),
            ],
            out_specs=pl.BlockSpec((B, tf), lambda j: (0, j)),
        ),
        compiler_params=pltpu.CompilerParams(
            dimension_semantics=("parallel",)),
    )(af, bf)
    return out[:, :F].reshape(shape)


# ----------------------------------------------------------------------------
# Pure-JAX reference ops (independent path used only for the correctness check)
# ----------------------------------------------------------------------------
def ref_linear(a, w, b, activation=None):
    y = jnp.dot(a, w, precision=jax.lax.Precision.HIGHEST) + b
    if activation == "silu":
        y = y * jax.nn.sigmoid(y)
    return y


def ref_conv2d(x, w, b, stride=1, padding=1):
    y = jax.lax.conv_general_dilated(
        x, w, window_strides=(stride, stride),
        padding=((padding, padding), (padding, padding)),
        dimension_numbers=("NCHW", "OIHW", "NCHW"),
        precision=jax.lax.Precision.HIGHEST)
    return y + b.reshape(1, -1, 1, 1)


def ref_conv1x1(x, w, b):
    y = jnp.einsum("bchw,cd->bdhw", x, w, precision=jax.lax.Precision.HIGHEST)
    return y + b.reshape(1, -1, 1, 1)


def ref_groupnorm(x, gamma, beta, silu=False, num_groups=32):
    B, C, H, W = x.shape
    xg = x.reshape(B, num_groups, -1)
    mean = xg.mean(axis=2, keepdims=True)
    var = ((xg - mean) ** 2).mean(axis=2, keepdims=True)
    y = ((xg - mean) / jnp.sqrt(var + 1e-5)).reshape(B, C, H, W)
    y = y * gamma.reshape(1, C, 1, 1) + beta.reshape(1, C, 1, 1)
    if silu:
        y = y * jax.nn.sigmoid(y)
    return y


def ref_scale_shift_silu(h, scale, shift):
    y = h * (1.0 + scale[:, :, None, None]) + shift[:, :, None, None]
    return y * jax.nn.sigmoid(y)


def ref_attention(q, k, v):
    d = q.shape[-1]
    scale = 1.0 / math.sqrt(math.sqrt(d))
    s = jnp.einsum("bnd,bmd->bnm", q * scale, k * scale,
                   precision=jax.lax.Precision.HIGHEST)
    s = s - s.max(axis=-1, keepdims=True)
    p = jnp.exp(s)
    p = p / p.sum(axis=-1, keepdims=True)
    return jnp.einsum("bnm,bmd->bnd", p, v, precision=jax.lax.Precision.HIGHEST)


def ref_silu(x):
    return x * jax.nn.sigmoid(x)


def ref_add(a, b):
    return a + b


PALLAS_OPS = dict(linear=pallas_linear, conv2d=pallas_conv2d,
                  conv1x1=pallas_conv1x1, gn=pallas_groupnorm,
                  ssilu=pallas_scale_shift_silu, attn=pallas_attention,
                  silu=pallas_silu, add=pallas_add)

REF_OPS = dict(linear=ref_linear, conv2d=ref_conv2d, conv1x1=ref_conv1x1,
               gn=ref_groupnorm, ssilu=ref_scale_shift_silu,
               attn=ref_attention, silu=ref_silu, add=ref_add)


# ----------------------------------------------------------------------------
# Parameter construction mirroring the guided-diffusion UNetModel layout
# ----------------------------------------------------------------------------
def _conv_params(key, cin, cout, k):
    w = jax.random.normal(key, (cout, cin, k, k), jnp.float32) / math.sqrt(cin * k * k)
    return {"w": w, "b": jnp.zeros((cout,), jnp.float32)}


def _linear_params(key, cin, cout):
    w = jax.random.normal(key, (cin, cout), jnp.float32) / math.sqrt(cin)
    return {"w": w, "b": jnp.zeros((cout,), jnp.float32)}


def _gn_params(c):
    return {"g": jnp.ones((c,), jnp.float32), "b": jnp.zeros((c,), jnp.float32)}


def _resblock_params(key, cin, cout, emb_ch):
    ks = jax.random.split(key, 4)
    p = {"in_gn": _gn_params(cin),
         "in_conv": _conv_params(ks[0], cin, cout, 3),
         "emb_lin": _linear_params(ks[1], emb_ch, 2 * cout),
         "out_gn": _gn_params(cout),
         "out_conv": _conv_params(ks[2], cout, cout, 3)}
    if cin != cout:
        p["skip"] = _linear_params(ks[3], cin, cout)   # 1x1 conv as (Cin, Cout)
    return p


def _attn_block_params(key, c):
    k1, k2 = jax.random.split(key)
    return {"gn": _gn_params(c),
            "qkv": _linear_params(k1, c, 3 * c),
            "proj": _linear_params(k2, c, c)}


def build_params(key, in_ch, out_ch, model_ch=64, ch_mult=(1, 2, 2, 2),
                 num_res=1, attn_ds=(16,), num_heads=4):
    emb_ch = 4 * model_ch
    keys = iter(jax.random.split(key, 128))
    P = {"model_ch": model_ch}
    P["time"] = [_linear_params(next(keys), model_ch, emb_ch),
                 _linear_params(next(keys), emb_ch, emb_ch)]

    ch = int(ch_mult[0] * model_ch)
    input_blocks = [[{"type": "conv", "p": _conv_params(next(keys), in_ch, ch, 3)}]]
    input_chans = [ch]
    ds = 1
    for level, mult in enumerate(ch_mult):
        for _ in range(num_res):
            out_c = int(mult * model_ch)
            layers = [{"type": "res", "cout": out_c,
                       "p": _resblock_params(next(keys), ch, out_c, emb_ch)}]
            ch = out_c
            if ds in attn_ds:
                layers.append({"type": "attn", "c": ch, "heads": num_heads,
                               "p": _attn_block_params(next(keys), ch)})
            input_blocks.append(layers)
            input_chans.append(ch)
        if level != len(ch_mult) - 1:
            input_blocks.append([{"type": "down",
                                  "p": _conv_params(next(keys), ch, ch, 3)}])
            input_chans.append(ch)
            ds *= 2
    P["input_blocks"] = input_blocks

    P["middle"] = [
        {"type": "res", "cout": ch, "p": _resblock_params(next(keys), ch, ch, emb_ch)},
        {"type": "attn", "c": ch, "heads": num_heads,
         "p": _attn_block_params(next(keys), ch)},
        {"type": "res", "cout": ch, "p": _resblock_params(next(keys), ch, ch, emb_ch)},
    ]

    output_blocks = []
    for level, mult in list(enumerate(ch_mult))[::-1]:
        for i in range(num_res + 1):
            ich = input_chans.pop()
            out_c = int(mult * model_ch)
            layers = [{"type": "res", "cout": out_c,
                       "p": _resblock_params(next(keys), ch + ich, out_c, emb_ch)}]
            ch = out_c
            if ds in attn_ds:
                layers.append({"type": "attn", "c": ch, "heads": num_heads,
                               "p": _attn_block_params(next(keys), ch)})
            if level and i == num_res:
                layers.append({"type": "up",
                               "p": _conv_params(next(keys), ch, ch, 3)})
                ds //= 2
            output_blocks.append(layers)
    P["output_blocks"] = output_blocks

    P["out_gn"] = _gn_params(ch)
    P["out_conv"] = _conv_params(next(keys), ch, out_ch, 3)
    P["residual"] = None if in_ch == out_ch else _linear_params(next(keys), in_ch, out_ch)
    return P


# ----------------------------------------------------------------------------
# Shared forward structure (op implementations supplied by PALLAS_OPS / REF_OPS)
# ----------------------------------------------------------------------------
def timestep_embedding(t, dim, max_period=10000.0):
    half = dim // 2
    freqs = jnp.exp(-math.log(max_period) * jnp.arange(half, dtype=jnp.float32) / half)
    args = t.astype(jnp.float32)[:, None] * freqs[None, :]
    return jnp.concatenate([jnp.cos(args), jnp.sin(args)], axis=-1)


def unet_forward(P, x, t, ops):
    emb = timestep_embedding(t, P["model_ch"])
    emb = ops["linear"](emb, P["time"][0]["w"], P["time"][0]["b"], activation="silu")
    emb = ops["linear"](emb, P["time"][1]["w"], P["time"][1]["b"], activation=None)
    emb_silu = ops["silu"](emb)

    def res_fwd(xin, layer):
        p, cout = layer["p"], layer["cout"]
        h = ops["gn"](xin, p["in_gn"]["g"], p["in_gn"]["b"], silu=True)
        h = ops["conv2d"](h, p["in_conv"]["w"], p["in_conv"]["b"], stride=1, padding=1)
        eo = ops["linear"](emb_silu, p["emb_lin"]["w"], p["emb_lin"]["b"], activation=None)
        scale, shift = eo[:, :cout], eo[:, cout:]
        h = ops["gn"](h, p["out_gn"]["g"], p["out_gn"]["b"], silu=False)
        h = ops["ssilu"](h, scale, shift)
        h = ops["conv2d"](h, p["out_conv"]["w"], p["out_conv"]["b"], stride=1, padding=1)
        skip = xin
        if "skip" in p:
            skip = ops["conv1x1"](xin, p["skip"]["w"], p["skip"]["b"])
        return skip + h

    def attn_fwd(xin, layer):
        p, C, heads = layer["p"], layer["c"], layer["heads"]
        B_, _, H, W = xin.shape
        N = H * W
        d = C // heads
        xn = ops["gn"](xin, p["gn"]["g"], p["gn"]["b"], silu=False)
        xf = xn.transpose(0, 2, 3, 1).reshape(B_ * N, C)
        qkv = ops["linear"](xf, p["qkv"]["w"], p["qkv"]["b"], activation=None)
        qkv = qkv.reshape(B_, N, 3 * C).transpose(0, 2, 1)            # (B, 3C, N)
        qkv = qkv.reshape(B_ * heads, 3 * d, N)                       # legacy head split
        q = qkv[:, 0:d].transpose(0, 2, 1)                            # (BH, N, d)
        k = qkv[:, d:2 * d].transpose(0, 2, 1)
        v = qkv[:, 2 * d:].transpose(0, 2, 1)
        a = ops["attn"](q, k, v)                                      # (BH, N, d)
        a = a.transpose(0, 2, 1).reshape(B_, C, N)
        af = a.transpose(0, 2, 1).reshape(B_ * N, C)
        h = ops["linear"](af, p["proj"]["w"], p["proj"]["b"], activation=None)
        h = h.reshape(B_, N, C).transpose(0, 2, 1).reshape(B_, C, H, W)
        return xin + h

    def run_layer(h, layer):
        lt = layer["type"]
        if lt == "conv":
            return ops["conv2d"](h, layer["p"]["w"], layer["p"]["b"], stride=1, padding=1)
        if lt == "down":
            return ops["conv2d"](h, layer["p"]["w"], layer["p"]["b"], stride=2, padding=1)
        if lt == "up":
            h2 = jnp.repeat(jnp.repeat(h, 2, axis=2), 2, axis=3)      # nearest x2
            return ops["conv2d"](h2, layer["p"]["w"], layer["p"]["b"], stride=1, padding=1)
        if lt == "res":
            return res_fwd(h, layer)
        if lt == "attn":
            return attn_fwd(h, layer)
        raise ValueError(lt)

    hs = []
    h = x
    for block in P["input_blocks"]:
        for layer in block:
            h = run_layer(h, layer)
        hs.append(h)
    for layer in P["middle"]:
        h = run_layer(h, layer)
    for block in P["output_blocks"]:
        h = jnp.concatenate([h, hs.pop()], axis=1)
        for layer in block:
            h = run_layer(h, layer)
    h = ops["gn"](h, P["out_gn"]["g"], P["out_gn"]["b"], silu=True)
    return ops["conv2d"](h, P["out_conv"]["w"], P["out_conv"]["b"], stride=1, padding=1)


def residual_unet_forward(P, x, t, ops):
    model_out = unet_forward(P, x, t, ops)
    if P["residual"] is None:
        res = x                                      # nn.Identity()
    else:
        res = ops["conv1x1"](x, P["residual"]["w"], P["residual"]["b"])
    return ops["add"](res, model_out)


# ----------------------------------------------------------------------------
# Main
# ----------------------------------------------------------------------------
if __name__ == "__main__":
    B, IN_CH, OUT_CH, IMG = 2, 4, 4, 16

    key = jax.random.PRNGKey(0)
    kp, kx, kt = jax.random.split(key, 3)
    params = build_params(kp, IN_CH, OUT_CH)
    x = jax.random.normal(kx, (B, IN_CH, IMG, IMG), dtype=jnp.float32)
    t = jax.random.uniform(kt, (B,), dtype=jnp.float32) * 1000.0

    out = residual_unet_forward(params, x, t, PALLAS_OPS)
    out = jax.block_until_ready(out)

    ref = residual_unet_forward(params, x, t, REF_OPS)
    ref = jax.block_until_ready(ref)

    assert out.shape == (B, OUT_CH, IMG, IMG) and out.dtype == jnp.float32
    assert bool(jnp.all(jnp.isfinite(out)))
    assert jnp.allclose(out, ref, atol=1e-2, rtol=1e-2), \
        float(jnp.max(jnp.abs(out - ref)))

    print("KERNEL_OK")
</pallas_src>

<mosaic_0001>
module attributes {stable_mosaic.version = 11 : i64} {
  func.func @_matmul_kernel(%arg0: i32, %arg1: memref<8x64xf32, #tpu.memory_space<vmem>>, %arg2: memref<64x256xf32, #tpu.memory_space<vmem>>, %arg3: memref<1x256xf32, #tpu.memory_space<vmem>>, %arg4: memref<8x256xf32, #tpu.memory_space<vmem>>) attributes {dimension_semantics = [#tpu.dimension_semantics<parallel>], iteration_bounds = array<i64: 1>, scalar_prefetch = 0 : i64, scratch_operands = 0 : i64, tpu.core_type = #tpu.core_type<tc>, window_params = [{transform_indices = @transform_0, window_bounds = array<i64: 8, 64>}, {pipeline_mode = #tpu.pipeline_mode<synchronous>, transform_indices = @transform_1, window_bounds = array<i64: 64, 256>}, {pipeline_mode = #tpu.pipeline_mode<synchronous>, transform_indices = @transform_2, window_bounds = array<i64: 1, 256>}, {transform_indices = @transform_3, window_bounds = array<i64: 8, 256>}]} {
    %c0 = arith.constant 0 : index
    %c0_0 = arith.constant 0 : index
    %0 = vector.load %arg1[%c0, %c0_0] : memref<8x64xf32, #tpu.memory_space<vmem>>, vector<8x64xf32>
    %c0_1 = arith.constant 0 : index
    %c0_2 = arith.constant 0 : index
    %1 = vector.load %arg2[%c0_1, %c0_2] : memref<64x256xf32, #tpu.memory_space<vmem>>, vector<64x256xf32>
    %cst = arith.constant dense<0.000000e+00> : vector<8x256xf32>
    %2 = tpu.matmul %0, %1, %cst {dimension_numbers = #tpu.dot_dimension_numbers<[1], [0], [0], [1], [0, 0, 1, 1], [], []>} : vector<8x64xf32>, vector<64x256xf32>, vector<8x256xf32> -> vector<8x256xf32>
    %c0_3 = arith.constant 0 : index
    %c0_4 = arith.constant 0 : index
    %3 = vector.load %arg3[%c0_3, %c0_4] : memref<1x256xf32, #tpu.memory_space<vmem>>, vector<1x256xf32>
    %4 = vector.broadcast %3 : vector<1x256xf32> to vector<8x256xf32>
    %5 = arith.addf %2, %4 : vector<8x256xf32>
    %6 = arith.negf %5 : vector<8x256xf32>
    %7 = math.exp %6 : vector<8x256xf32>
    %cst_5 = arith.constant 1.000000e+00 : f32
    %8 = vector.broadcast %cst_5 : f32 to vector<8x256xf32>
    %9 = arith.addf %8, %7 : vector<8x256xf32>
    %10 = arith.divf %8, %9 : vector<8x256xf32>
    %11 = arith.mulf %5, %10 : vector<8x256xf32>
    %c0_6 = arith.constant 0 : index
    %c0_7 = arith.constant 0 : index
    %12 = vector.load %arg4[%c0_6, %c0_7] : memref<8x256xf32, #tpu.memory_space<vmem>>, vector<8x256xf32>
    tpu.vector_store %arg4[%c0_6, %c0_7], %11 {strides = array<i32>} : memref<8x256xf32, #tpu.memory_space<vmem>>, vector<8x256xf32>,
    return
  }
  func.func @transform_0(%arg0: i32) -> (i32, i32) {
    %c0_i32 = arith.constant 0 : i32
    %c0_i32_0 = arith.constant 0 : i32
    return %arg0, %c0_i32 : i32, i32
  }
  func.func @transform_1(%arg0: i32) -> (i32, i32) {
    %c0_i32 = arith.constant 0 : i32
    %c0_i32_0 = arith.constant 0 : i32
    %c0_i32_1 = arith.constant 0 : i32
    return %c0_i32, %c0_i32_0 : i32, i32
  }
  func.func @transform_2(%arg0: i32) -> (i32, i32) {
    %c0_i32 = arith.constant 0 : i32
    %c0_i32_0 = arith.constant 0 : i32
    %c0_i32_1 = arith.constant 0 : i32
    return %c0_i32, %c0_i32_0 : i32, i32
  }
  func.func @transform_3(%arg0: i32) -> (i32, i32) {
    %c0_i32 = arith.constant 0 : i32
    %c0_i32_0 = arith.constant 0 : i32
    return %arg0, %c0_i32 : i32, i32
  }
}

</mosaic_0001>

<llo_original>
// kernel: pallas_linear.1
$region0: #{pallas_linear.1}
  #allocation0 [shape = 'u32[]', space=smem, size = 0x4, offset = 0x4, fixed_abs, tag = 'smem constant byte address 0x4 - core index']
  #allocation1 [shape = 'u32[144,128]{1,0:T(1,128)}', space=vmem, size = 0x12000, scoped, tag = 'internal scratch']
  %s0 = inlined_call_operand.vmem [shape: f32[8,64], index: 0, kind: input, shape index: {}]
  %s1 = inlined_call_operand.hbm [shape: f32[64,256], index: 1, kind: input, shape index: {}]
  %s2 = inlined_call_operand.vmem [shape: f32[1,256], index: 2, kind: input, shape index: {}]
  %s3 = inlined_call_operand.vmem [shape: f32[8,256], index: 3, kind: output, shape index: {}]
  %s4 = sld [smem:[#allocation0]]
  $region26: #{pallas_linear.1} parent=0
    _
  %s6 = ssub.s32 1, %s4
  %s7 = scalar_select 0, %s6, %s4
  $region1: #{pallas_linear.1} parent=0
    #allocation2 [shape = 'u8[65536]{0}', space=vmem, size = 0x10000, scoped, tag = 'input window, operand 1, single buffered']
    #allocation3 [shape = 's32[1]{0}', space=sflag, size = 0x4, scoped, tag = 'scoped memory for pallas_linear.1']
    %8 = vsyncpa [#allocation3], 0
    // Predicated region
    $region2: #{pallas_linear.1} parent=1 // pred_check
      _
    $region3: #{pallas_linear.1} parent=1 // pred_check_branch
      %10 = sbr.rel (0) target = $region5
    $region4: #{pallas_linear.1} parent=1 // pred_region
      _
    $region5: #{pallas_linear.1} parent=1 // pred_fallthru
      _
    // Predicated region
    $region6: #{pallas_linear.1} parent=1 // pred_check
      _
    $region7: #{pallas_linear.1} parent=1 // pred_check_branch
      %12 = sbr.rel (0) target = $region9
    $region8: #{pallas_linear.1} parent=1 // pred_region
      %s14 = ssub.s32 2048, 2048
      %15 = vsyncadd [#allocation3], %s14
      %s16 = sshll.u32 [#allocation2], 4
      %s17 = int_to_ptr.vmem [resolvable:$true] %s16
      %22 = dma.hbm_to_vmem [thread:$0]  %s1, 2048, %s17, [#allocation3], 256, 256, 16
    $region9: #{pallas_linear.1} parent=1 // pred_fallthru
      _
    // Predicated region
    $region10: #{pallas_linear.1} parent=1 // pred_check
      _
    $region11: #{pallas_linear.1} parent=1 // pred_check_branch
      %24 = sbr.rel (0) target = $region13
    $region12: #{pallas_linear.1} parent=1 // pred_region
      _
    $region13: #{pallas_linear.1} parent=1 // pred_fallthru
      _
    // Predicated region
    $region14: #{pallas_linear.1} parent=1 // pred_check
      _
    $region15: #{pallas_linear.1} parent=1 // pred_check_branch
      %26 = sbr.rel (0) target = $region17
    $region16: #{pallas_linear.1} parent=1 // pred_region
      %27 = dma.done [#allocation3], 2048
    $region17: #{pallas_linear.1} parent=1 // pred_fallthru
      _
    %v28 = vld [vmem:[%s0] sm:$0xff]
    %v29 = vld [vmem:[#allocation2] sm:$0xff]
    %v30 = vld [vmem:[#allocation2 + $0x8] sm:$0xff]
    %v31 = vld [vmem:[#allocation2 + $0x10] sm:$0xff]
    %v32 = vld [vmem:[#allocation2 + $0x18] sm:$0xff]
    %v33 = vld [vmem:[#allocation2 + $0x20] sm:$0xff]
    %v34 = vld [vmem:[#allocation2 + $0x28] sm:$0xff]
    %v35 = vld [vmem:[#allocation2 + $0x30] sm:$0xff]
    %v36 = vld [vmem:[#allocation2 + $0x38] sm:$0xff]
    %v37 = vld [vmem:[#allocation2 + $0x40] sm:$0xff]
    %v38 = vld [vmem:[#allocation2 + $0x48] sm:$0xff]
    %v39 = vld [vmem:[#allocation2 + $0x50] sm:$0xff]
    %v40 = vld [vmem:[#allocation2 + $0x58] sm:$0xff]
    %v41 = vld [vmem:[#allocation2 + $0x60] sm:$0xff]
    %v42 = vld [vmem:[#allocation2 + $0x68] sm:$0xff]
    %v43 = vld [vmem:[#allocation2 + $0x70] sm:$0xff]
    %v44 = vld [vmem:[#allocation2 + $0x78] sm:$0xff]
    %v45 = vld [vmem:[%s2] sm:$0x3]
    %v47 = vlaneseq
    %v48 = vshrl.u32 %v47, 7
    %v49 = vsub.s32 0, %v48
    %v50 = vrot.slane %v45, %v49
    %v51 = vlaneseq
    %v52 = vshrl.u32 %v51, 7
    %v53 = vsub.s32 1, %v52
    %v54 = vrot.slane %v45, %v53
    %vm57 = vcmask 523264
    %v59 = vsel %vm57, %v28, 0
    %61 = vmatprep.subr.mxu0 0.0
    %62 = vmatpush1.msra.mxu0 0.0
    %63 = vmatprep.subr.mxu0 0.0
    %64 = vmatpush1.msra.mxu0 0.0
    %65 = vmatprep.subr.mxu0 0.0
    %66 = vmatpush1.msra.mxu0 0.0
    %67 = vmatprep.subr.mxu0 0.0
    %68 = vmatpush1.msra.mxu0 0.0
    %69 = vmatprep.subr.mxu0 0.0
    %70 = vmatpush1.msra.mxu0 0.0
    %71 = vmatprep.subr.mxu0 0.0
    %72 = vmatpush1.msra.mxu0 0.0
    %73 = vmatprep.subr.mxu0 0.0
    %74 = vmatpush1.msra.mxu0 0.0
    %75 = vmatprep.subr.mxu0 0.0
    %76 = vmatpush1.msra.mxu0 0.0
    %77 = vmatprep.subr.mxu0 %v44
    %78 = vmatpush1.msra.mxu0 %v43
    %79 = vmatprep.subr.mxu0 %v42
    %80 = vmatpush1.msra.mxu0 %v41
    %81 = vmatprep.subr.mxu0 %v40
    %82 = vmatpush1.msra.mxu0 %v39
    %83 = vmatprep.subr.mxu0 %v38
    %84 = vmatpush1.msra.mxu0 %v37
    %85 = vmatprep.subr.mxu0 %v36
    %86 = vmatpush1.msra.mxu0 %v35
    %87 = vmatprep.subr.mxu0 %v34
    %88 = vmatpush1.msra.mxu0 %v33
    %89 = vmatprep.subr.mxu0 %v32
    %90 = vmatpush1.msra.mxu0 %v31
    %91 = vmatprep.subr.mxu0 %v30
    %92 = vmatpush1.msra.mxu0 %v29
    %93 = vmatprep.subr.mxu0 0.0
    %94 = vmatpush2.msra.mxu0 0.0
    %95 = vmatprep.subr.mxu0 0.0
    %96 = vmatpush2.msra.mxu0 0.0
    %97 = vmatprep.subr.mxu0 0.0
    %98 = vmatpush2.msra.mxu0 0.0
    %99 = vmatprep.subr.mxu0 0.0
    %100 = vmatpush2.msra.mxu0 0.0
    %101 = vmatprep.subr.mxu0 0.0
    %102 = vmatpush2.msra.mxu0 0.0
    %103 = vmatprep.subr.mxu0 0.0
    %104 = vmatpush2.msra.mxu0 0.0
    %105 = vmatprep.subr.mxu0 0.0
    %106 = vmatpush2.msra.mxu0 0.0
    %107 = vmatprep.subr.mxu0 0.0
    %108 = vmatpush2.msra.mxu0 0.0
    %109 = vmatprep.subr.mxu0 0.0
    %110 = vmatpush2.msra.mxu0 0.0
    %111 = vmatprep.subr.mxu0 0.0
    %112 = vmatpush2.msra.mxu0 0.0
    %113 = vmatprep.subr.mxu0 0.0
    %114 = vmatpush2.msra.mxu0 0.0
    %115 = vmatprep.subr.mxu0 0.0
    %116 = vmatpush2.msra.mxu0 0.0
    %117 = vmatprep.subr.mxu0 0.0
    %118 = vmatpush2.msra.mxu0 0.0
    %119 = vmatprep.subr.mxu0 0.0
    %120 = vmatpush2.msra.mxu0 0.0
    %121 = vmatprep.subr.mxu0 0.0
    %122 = vmatpush2.msra.mxu0 0.0
    %123 = vmatprep.subr.mxu0 0.0
    %124 = vmatpush2.msra.mxu0 0.0
    %125 = vmatprep.mubr.f32.mxu0 0.0
    %126 = vmatmul.mubr.f32.gmra.mxu0 %v59
    %v127 = vpop.f32.mrf.mxu0
    %v128 = vadd.f32 %v50, %v127
    %v129 = vpop.f32.mrf.mxu0
    %v130 = vadd.f32 %v54, %v129
    %131 = vdwg.mxu0
    %v132 = vxor.u32 %v128, 2147483648
    %v133 = vxor.u32 %v130, 2147483648
    %v134 = vmul.f32 %v132, 1.442695
    %v135 = vpow.pop %v134
    %v136 = vmul.f32 %v133, 1.442695
    %v137 = vpow.pop %v136
    %v138 = vadd.f32 %v135, 1.0
    %v139 = vadd.f32 %v137, 1.0
    %v140 = vrcp.pop %v138
    %v141 = vmul.f32 1.0, %v140
    %v142 = vrcp.pop %v139
    %v143 = vmul.f32 1.0, %v142
    %v144 = vmul.f32 %v128, %v141
    %v145 = vmul.f32 %v130, %v143
    %146 = vst [vmem:[%s3] sm:$0xff] %v144
    %147 = vst [vmem:[%s3 + $0x8] sm:$0xff] %v145
    // Predicated region
    $region18: #{pallas_linear.1} parent=1 // pred_check
      _
    $region19: #{pallas_linear.1} parent=1 // pred_check_branch
      %149 = sbr.rel (0) target = $region21
    $region20: #{pallas_linear.1} parent=1 // pred_region
      _
    $region21: #{pallas_linear.1} parent=1 // pred_fallthru
      _
    // Predicated region
    $region22: #{pallas_linear.1} parent=1 // pred_check
      _
    $region23: #{pallas_linear.1} parent=1 // pred_check_branch
      %151 = sbr.rel (0) target = $region25
    $region24: #{pallas_linear.1} parent=1 // pred_region
      _
    $region25: #{pallas_linear.1} parent=1 // pred_fallthru
      _
    %152 = vsyncpa [#allocation3], 1

</llo_original>
